<compile_context>
chip_gen: v5e
topology: v5e:2x2
jax: 0.10.0
libtpu: 0.0.40
codegen_flags: <defaults>
</compile_context>

<pallas_src>
import math
from functools import partial

import jax
import jax.numpy as jnp
from jax.experimental import pallas as pl
from jax.experimental.pallas import tpu as pltpu


# ----------------------------------------------------------------------------
# Generation-aware sizing (v5e/v6e: 128 MiB VMEM -> big tiles; v7x: 64 MiB)
# ----------------------------------------------------------------------------
def _vmem_capacity_bytes():
    try:
        info = pltpu.get_tpu_info()
        v = getattr(info, "vmem_capacity_bytes", None)
        if v:
            return int(v)
    except Exception:
        pass
    return 64 * 1024 * 1024      # conservative fallback (v7x-sized)


_VMEM_BYTES = _vmem_capacity_bytes()
_VMEM_LIMIT = max(32 * 1024 * 1024,
                  min(int(_VMEM_BYTES * 0.75), 100 * 1024 * 1024))
_TILE_MN = 1024 if _VMEM_BYTES >= 96 * 1024 * 1024 else 512
_ATTN_BUDGET = (8 * 1024 * 1024 if _VMEM_BYTES >= 96 * 1024 * 1024
                else 4 * 1024 * 1024)

_GELU_C = math.sqrt(2.0 / math.pi)


def _gelu_tanh(x):
    # tanh-approximate GELU: tanh lowers to the EUP slot, keeping the VALU free.
    # (Small systematic deviation from torch's erf GELU; acceptable for inference.)
    return 0.5 * x * (1.0 + jnp.tanh(_GELU_C * (x + 0.044715 * x * x * x)))


def _to_bf16(v):
    return v if v.dtype == jnp.bfloat16 else v.astype(jnp.bfloat16)


def _round_up(n, m):
    return ((n + m - 1) // m) * m


def _pick_tile(n, align, target):
    """Largest divisor of n that is a multiple of `align` (preferring 2*align
    for MXU width) and <= target; falls back to the full dim (legal for a
    BlockSpec when it equals the array dim)."""
    if n <= target:
        return n
    for a in (2 * align, align):
        start = target - (target % a)
        for d in range(start, 0, -a):
            if n % d == 0:
                return d
    # TODO(synk): pad awkward channel dims to 128-multiples at the weight level
    # instead of falling back to the full axis.
    return n


def _row_tiling(M, target):
    """Return (padded_M, tm) so the row axis never falls back to a huge full-dim
    block (guards v7x's 64 MiB VMEM)."""
    if M <= target:
        return M, M
    for d in range(target, 7, -1):
        if M % d == 0 and d % 8 == 0:
            return M, d
    Mp = _round_up(M, target)
    return Mp, target


# ----------------------------------------------------------------------------
# Pallas kernels
# ----------------------------------------------------------------------------
def _linear_kernel(*refs, activation, has_residual):
    if has_residual:
        x_ref, w_ref, b_ref, res_ref, o_ref, acc_ref = refs
    else:
        x_ref, w_ref, b_ref, o_ref, acc_ref = refs
        res_ref = None

    k = pl.program_id(2)

    @pl.when(k == 0)
    def _():
        acc_ref[...] = jnp.zeros_like(acc_ref)

    # bf16 MXU operands, f32 accumulation (operands arrive bf16 from HBM).
    acc_ref[...] += jnp.dot(_to_bf16(x_ref[...]), _to_bf16(w_ref[...]),
                            preferred_element_type=jnp.float32)

    @pl.when(k == pl.num_programs(2) - 1)
    def _():
        y = acc_ref[...] + b_ref[...].astype(jnp.float32)
        if activation == "gelu":
            y = _gelu_tanh(y)
        elif activation == "relu":
            y = jnp.maximum(y, 0.0)
        if res_ref is not None:
            y = y + res_ref[...].astype(jnp.float32)
        o_ref[...] = y.astype(o_ref.dtype)


def pallas_linear(x, w, b, activation=None, residual=None):
    """y = act(x @ w + b) [+ residual]; x:(M,K) w:(K,N) b:(N,). Output dtype = x dtype."""
    M, K = x.shape
    N = w.shape[1]
    Mp, tm = _row_tiling(M, _TILE_MN)
    if Mp != M:
        x = jnp.pad(x, ((0, Mp - M), (0, 0)))
        if residual is not None:
            residual = jnp.pad(residual, ((0, Mp - M), (0, 0)))
    tn = _pick_tile(N, 128, _TILE_MN)
    tk = _pick_tile(K, 128, _TILE_MN)
    grid = (Mp // tm, N // tn, K // tk)

    in_specs = [
        pl.BlockSpec((tm, tk), lambda i, j, k: (i, k)),
        pl.BlockSpec((tk, tn), lambda i, j, k: (k, j)),
        pl.BlockSpec((1, tn), lambda i, j, k: (0, j)),
    ]
    args = [x, w, b.reshape(1, N)]
    if residual is not None:
        in_specs.append(pl.BlockSpec((tm, tn), lambda i, j, k: (i, j)))
        args.append(residual)

    out = pl.pallas_call(
        partial(_linear_kernel, activation=activation,
                has_residual=residual is not None),
        out_shape=jax.ShapeDtypeStruct((Mp, N), x.dtype),
        grid=grid,
        in_specs=in_specs,
        out_specs=pl.BlockSpec((tm, tn), lambda i, j, k: (i, j)),
        scratch_shapes=[pltpu.VMEM((tm, tn), jnp.float32)],
        compiler_params=pltpu.CompilerParams(
            dimension_semantics=("parallel", "parallel", "arbitrary"),
            vmem_limit_bytes=_VMEM_LIMIT),
    )(*args)
    return out[:M] if Mp != M else out


def _ln_linear_kernel(x_ref, g_ref, bln_ref, w_ref, b_ref, o_ref, xn_ref,
                      *, eps, activation):
    # LayerNorm computed exactly once per row tile (j == 0) into bf16 VMEM
    # scratch; every N tile then just runs the MXU matmul on the cached result.
    @pl.when(pl.program_id(1) == 0)
    def _():
        x = x_ref[...].astype(jnp.float32)
        mean = jnp.mean(x, axis=-1, keepdims=True)
        xc = x - mean
        var = jnp.mean(xc * xc, axis=-1, keepdims=True)
        xn = xc * jax.lax.rsqrt(var + eps)
        xn = xn * g_ref[...].astype(jnp.float32) + bln_ref[...].astype(jnp.float32)
        xn_ref[...] = xn.astype(jnp.bfloat16)

    y = jnp.dot(xn_ref[...], _to_bf16(w_ref[...]),
                preferred_element_type=jnp.float32)
    y = y + b_ref[...].astype(jnp.float32)
    if activation == "gelu":
        y = _gelu_tanh(y)
    elif activation == "relu":
        y = jnp.maximum(y, 0.0)
    o_ref[...] = y.astype(o_ref.dtype)


def pallas_ln_linear(x, g, b_ln, w, b, activation=None, eps=1e-6):
    """y = act(LayerNorm(x) @ w + b); K (=channel) axis kept whole so the
    normalization sees full rows."""
    M, K = x.shape
    N = w.shape[1]
    Mp, tm = _row_tiling(M, _TILE_MN)
    if Mp != M:
        x = jnp.pad(x, ((0, Mp - M), (0, 0)))
    # Full-N tile when the whole (K, N) weight is modest, otherwise tile N;
    # the cached-LN scratch makes N tiling cheap either way.
    if K * N * 2 <= 8 * 1024 * 1024:
        tn = N
    else:
        tn = _pick_tile(N, 128, _TILE_MN)
    grid = (Mp // tm, N // tn)

    out = pl.pallas_call(
        partial(_ln_linear_kernel, eps=eps, activation=activation),
        out_shape=jax.ShapeDtypeStruct((Mp, N), x.dtype),
        grid=grid,
        in_specs=[
            pl.BlockSpec((tm, K), lambda i, j: (i, 0)),
            pl.BlockSpec((1, K), lambda i, j: (0, 0)),
            pl.BlockSpec((1, K), lambda i, j: (0, 0)),
            pl.BlockSpec((K, tn), lambda i, j: (0, j)),
            pl.BlockSpec((1, tn), lambda i, j: (0, j)),
        ],
        out_specs=pl.BlockSpec((tm, tn), lambda i, j: (i, j)),
        scratch_shapes=[pltpu.VMEM((tm, K), jnp.bfloat16)],
        compiler_params=pltpu.CompilerParams(
            dimension_semantics=("parallel", "arbitrary"),
            vmem_limit_bytes=_VMEM_LIMIT),
    )(x, g.reshape(1, K), b_ln.reshape(1, K), w, b.reshape(1, N))
    return out[:M] if Mp != M else out


def _layernorm_kernel(x_ref, g_ref, b_ref, o_ref, *, eps):
    x = x_ref[...].astype(jnp.float32)
    mean = jnp.mean(x, axis=-1, keepdims=True)
    xc = x - mean
    var = jnp.mean(xc * xc, axis=-1, keepdims=True)
    y = xc * jax.lax.rsqrt(var + eps)
    y = y * g_ref[...].astype(jnp.float32) + b_ref[...].astype(jnp.float32)
    o_ref[...] = y.astype(o_ref.dtype)


def pallas_layernorm(x, g, b, eps=1e-6):
    """Row-tiled standalone LayerNorm (used when window padding prevents fusion)."""
    M, C = x.shape
    Mp, tm = _row_tiling(M, _TILE_MN)
    if Mp != M:
        x = jnp.pad(x, ((0, Mp - M), (0, 0)))
    grid = (Mp // tm,)
    out = pl.pallas_call(
        partial(_layernorm_kernel, eps=eps),
        out_shape=jax.ShapeDtypeStruct((Mp, C), x.dtype),
        grid=grid,
        in_specs=[
            pl.BlockSpec((tm, C), lambda i: (i, 0)),
            pl.BlockSpec((1, C), lambda i: (0, 0)),
            pl.BlockSpec((1, C), lambda i: (0, 0)),
        ],
        out_specs=pl.BlockSpec((tm, C), lambda i: (i, 0)),
        compiler_params=pltpu.CompilerParams(
            dimension_semantics=("parallel",),
            vmem_limit_bytes=_VMEM_LIMIT),
    )(x, g.reshape(1, C), b.reshape(1, C))
    return out[:M] if Mp != M else out


def _flash_attn_kernel(q_ref, k_ref, v_ref, o_ref, m_sc, l_sc, acc_sc, *, scale):
    # Flash-style online softmax over the kv axis (grid axis 2, "arbitrary").
    j = pl.program_id(2)

    @pl.when(j == 0)
    def _():
        m_sc[...] = jnp.full(m_sc.shape, -jnp.inf, jnp.float32)
        l_sc[...] = jnp.zeros_like(l_sc)
        acc_sc[...] = jnp.zeros_like(acc_sc)

    # bf16 MXU operands, f32 accumulation.
    s = jnp.einsum("bqd,bkd->bqk", q_ref[...], k_ref[...],
                   preferred_element_type=jnp.float32) * scale
    m_prev = m_sc[...]
    m_new = jnp.maximum(m_prev, jnp.max(s, axis=-1, keepdims=True))
    alpha = jnp.exp(m_prev - m_new)
    p = jnp.exp(s - m_new)
    l_sc[...] = alpha * l_sc[...] + jnp.sum(p, axis=-1, keepdims=True)
    acc_sc[...] = alpha * acc_sc[...] + jnp.einsum(
        "bqk,bkd->bqd", p.astype(v_ref.dtype), v_ref[...],
        preferred_element_type=jnp.float32)
    m_sc[...] = m_new

    @pl.when(j == pl.num_programs(2) - 1)
    def _():
        o_ref[...] = (acc_sc[...] *
                      pl.reciprocal(l_sc[...], approx=True)).astype(o_ref.dtype)


def _pick_group(bh, tq, tkv, hd):
    """Batch*head rows per attention grid step: as many as fit the VMEM budget
    (double-buffered bf16 q/k/v/o + f32 scores/acc/m/l), while keeping >= 2 grid
    steps on the parallel axis so both TensorCores get work."""
    per = (2 * 2 * (tq * hd + 2 * tkv * hd + tq * hd)
           + 4 * (tq * tkv + tq * hd + 2 * tq))
    best = 1
    for g in range(1, bh + 1):
        if bh % g == 0 and g * per <= _ATTN_BUDGET:
            best = g
    if best == bh and bh > 1:
        for g in range(bh // 2, 0, -1):
            if bh % g == 0:
                best = g
                break
    return best


def pallas_attention(q, k, v):
    """q:(BH,Lq,hd) k,v:(BH,Lk,hd) bf16 -> (BH,Lq,hd); heads already folded into
    the batch dim; scale = 1/sqrt(hd)."""
    BH, Lq, hd = q.shape
    Lk = k.shape[1]
    scale = 1.0 / math.sqrt(hd)
    tq = _pick_tile(Lq, 8, 512)
    tkv = _pick_tile(Lk, 8, 512)
    G = _pick_group(BH, tq, tkv, hd)
    grid = (BH // G, Lq // tq, Lk // tkv)

    return pl.pallas_call(
        partial(_flash_attn_kernel, scale=scale),
        out_shape=jax.ShapeDtypeStruct((BH, Lq, hd), q.dtype),
        grid=grid,
        in_specs=[
            pl.BlockSpec((G, tq, hd), lambda i, qi, j: (i, qi, 0)),
            pl.BlockSpec((G, tkv, hd), lambda i, qi, j: (i, j, 0)),
            pl.BlockSpec((G, tkv, hd), lambda i, qi, j: (i, j, 0)),
        ],
        out_specs=pl.BlockSpec((G, tq, hd), lambda i, qi, j: (i, qi, 0)),
        scratch_shapes=[
            pltpu.VMEM((G, tq, 1), jnp.float32),   # running max
            pltpu.VMEM((G, tq, 1), jnp.float32),   # running sum
            pltpu.VMEM((G, tq, hd), jnp.float32),  # running output
        ],
        compiler_params=pltpu.CompilerParams(
            dimension_semantics=("parallel", "parallel", "arbitrary"),
            vmem_limit_bytes=_VMEM_LIMIT),
    )(q, k, v)


# ----------------------------------------------------------------------------
# Glue ops (plain JAX; reshapes / tiny pooling only)
# ----------------------------------------------------------------------------
def window_partition(x, window_size):
    B, H, W, C = x.shape
    pad_h = (window_size - H % window_size) % window_size
    pad_w = (window_size - W % window_size) % window_size
    if pad_h > 0 or pad_w > 0:
        x = jnp.pad(x, ((0, 0), (0, pad_h), (0, pad_w), (0, 0)))
    Hp, Wp = H + pad_h, W + pad_w
    x = x.reshape(B, Hp // window_size, window_size, Wp // window_size, window_size, C)
    windows = x.transpose(0, 1, 3, 2, 4, 5).reshape(-1, window_size, window_size, C)
    return windows, (Hp, Wp)


def window_unpartition(windows, window_size, pad_hw, hw):
    Hp, Wp = pad_hw
    H, W = hw
    B = windows.shape[0] // (Hp * Wp // window_size // window_size)
    x = windows.reshape(B, Hp // window_size, Wp // window_size, window_size, window_size, -1)
    x = x.transpose(0, 1, 3, 2, 4, 5).reshape(B, Hp, Wp, -1)
    if Hp > H or Wp > W:
        x = x[:, :H, :W, :]
    return x


def max_pool2d(x, stride):
    # nn.MaxPool2d(kernel=stride, stride=stride, ceil_mode=False) on NHWC data.
    B, H, W, C = x.shape
    sh, sw = stride
    Ho, Wo = H // sh, W // sw
    x = x[:, : Ho * sh, : Wo * sw, :].reshape(B, Ho, sh, Wo, sw, C)
    return jnp.max(x, axis=(2, 4))


# ----------------------------------------------------------------------------
# Model pieces
# ----------------------------------------------------------------------------
def patch_embed(x_nchw, w, b, stride=(4, 4), padding=(3, 3)):
    """7x7/s4 conv patch embed via XLA conv (avoids materializing 49x im2col in HBM).
    Returns NHWC bf16."""
    # TODO(synk): optional fused Pallas gather+matmul stem (scalar-prefetch window gather).
    y = jax.lax.conv_general_dilated(
        _to_bf16(x_nchw), _to_bf16(w),
        window_strides=stride,
        padding=[padding, padding],
        dimension_numbers=("NCHW", "OIHW", "NHWC"),
        preferred_element_type=jnp.float32)
    y = y + b.astype(jnp.float32)
    return y.astype(jnp.bfloat16)


def get_pos_embed(pos_embed, pos_embed_window, hw):
    h, w = hw
    if pos_embed.shape[2:] != (h, w):
        # TODO(synk): jax bicubic kernel differs slightly from torch F.interpolate(mode='bicubic')
        pe = jax.image.resize(pos_embed, (1, pos_embed.shape[1], h, w), method="bicubic")
    else:
        pe = pos_embed
    tile = tuple(p // q for p, q in zip(pe.shape, pos_embed_window.shape))
    pe = pe + jnp.tile(pos_embed_window, tile)
    return pe.transpose(0, 2, 3, 1)  # (1, h, w, C), f32


def multiscale_block(x, p, dim, dim_out, num_heads, window_size, q_stride, eps=1e-6):
    B, H, W, _ = x.shape
    shortcut = x
    x_flat = x.reshape(-1, dim)

    # ---- norm1 + attention branch ------------------------------------------
    if dim != dim_out:
        # dim-change shortcut: LayerNorm fused into the channel projection.
        sc = pallas_ln_linear(x_flat, p["norm1_g"], p["norm1_b"],
                              p["projd_w"], p["projd_b"], eps=eps)
        sc = sc.reshape(B, H, W, dim_out)
        if q_stride is not None:
            sc = max_pool2d(sc, q_stride)
        shortcut = sc

    pad_hw = None
    if window_size > 0:
        pad_h = (window_size - H % window_size) % window_size
        pad_w = (window_size - W % window_size) % window_size
        if pad_h > 0 or pad_w > 0:
            # Padding is inserted *after* norm1 in the reference, so LN cannot be
            # fused into qkv here (padded tokens must stay exactly zero post-norm).
            xn = pallas_layernorm(x_flat, p["norm1_g"], p["norm1_b"], eps=eps)
            xw, pad_hw = window_partition(xn.reshape(B, H, W, dim), window_size)
            Bw, Hw, Ww, _ = xw.shape
            qkv = pallas_linear(xw.reshape(-1, dim), p["qkv_w"], p["qkv_b"])
        else:
            # No padding -> partition is a pure permutation -> LN+qkv fuse safely.
            # TODO(synk): fold the window-partition permutation into the qkv
            # pallas_call via BlockSpec index_map (grid over (batch, win_row, win_col)).
            xw, pad_hw = window_partition(x, window_size)
            Bw, Hw, Ww, _ = xw.shape
            qkv = pallas_ln_linear(xw.reshape(-1, dim), p["norm1_g"], p["norm1_b"],
                                   p["qkv_w"], p["qkv_b"], eps=eps)
    else:
        Bw, Hw, Ww = B, H, W
        qkv = pallas_ln_linear(x_flat, p["norm1_g"], p["norm1_b"],
                               p["qkv_w"], p["qkv_b"], eps=eps)

    nH = num_heads
    hd = dim_out // nH
    # torch channel layout of the qkv output: [3][heads][head_dim]
    qkv = qkv.reshape(Bw, Hw, Ww, 3, nH, hd)
    q = qkv[:, :, :, 0]                                   # (Bw, Hw, Ww, nH, hd)
    k = qkv[:, :, :, 1].reshape(Bw, Hw * Ww, nH, hd)
    v = qkv[:, :, :, 2].reshape(Bw, Hw * Ww, nH, hd)
    if q_stride is not None:
        qp = max_pool2d(q.reshape(Bw, Hw, Ww, nH * hd), q_stride)
        Hq, Wq = qp.shape[1], qp.shape[2]
        q = qp.reshape(Bw, Hq * Wq, nH, hd)
    else:
        Hq, Wq = Hw, Ww
        q = q.reshape(Bw, Hq * Wq, nH, hd)

    # heads -> batch dim: the attention kernel then runs full-lane batched
    # matmuls, no per-head sub-128-lane slicing or Python head unroll inside.
    q = q.transpose(0, 2, 1, 3).reshape(Bw * nH, Hq * Wq, hd)
    k = k.transpose(0, 2, 1, 3).reshape(Bw * nH, Hw * Ww, hd)
    v = v.transpose(0, 2, 1, 3).reshape(Bw * nH, Hw * Ww, hd)

    o = pallas_attention(q, k, v)                         # (Bw*nH, Lq, hd)
    o = (o.reshape(Bw, nH, Hq * Wq, hd)
          .transpose(0, 2, 1, 3)
          .reshape(Bw * Hq * Wq, dim_out))

    if window_size > 0:
        o = pallas_linear(o, p["proj_w"], p["proj_b"]).reshape(Bw, Hq, Wq, dim_out)
        ws_up = window_size
        Hout, Wout = H, W
        if q_stride is not None:
            ws_up = window_size // q_stride[0]
            Hout, Wout = shortcut.shape[1], shortcut.shape[2]
            ph2 = (ws_up - Hout % ws_up) % ws_up
            pw2 = (ws_up - Wout % ws_up) % ws_up
            pad_hw = (Hout + ph2, Wout + pw2)
        o = window_unpartition(o, ws_up, pad_hw, (Hout, Wout))
        # TODO(synk): fold unpartition + residual into the proj kernel epilogue
        # for the no-padding windowed case (needs shortcut in window order).
        x = shortcut + o                                  # DropPath(p=0)/eval -> identity
    else:
        if shortcut.shape[:3] == (Bw, Hq, Wq):
            # Global attention: token order already matches the shortcut, so the
            # residual add rides the attn-proj epilogue (no extra HBM round trip).
            x = pallas_linear(o, p["proj_w"], p["proj_b"],
                              residual=shortcut.reshape(-1, dim_out))
            x = x.reshape(Bw, Hq, Wq, dim_out)
        else:
            o = pallas_linear(o, p["proj_w"], p["proj_b"]).reshape(Bw, Hq, Wq, dim_out)
            x = shortcut + o

    # ---- norm2 + MLP: LN fused into fc1(+GELU), residual fused into fc2 ------
    B2, H2, W2, _ = x.shape
    xf = x.reshape(-1, dim_out)
    h1 = pallas_ln_linear(xf, p["norm2_g"], p["norm2_b"],
                          p["mlp_w1"], p["mlp_b1"], activation="gelu", eps=eps)
    out = pallas_linear(h1, p["mlp_w2"], p["mlp_b2"], residual=xf)
    return out.reshape(B2, H2, W2, dim_out)


def hiera_forward(x_nchw, params, block_cfgs, stage_ends, return_interm_layers=True):
    x = patch_embed(x_nchw, params["patch_w"], params["patch_b"])          # (B, Ho, Wo, C) bf16
    pe = get_pos_embed(params["pos_embed"], params["pos_embed_window"], x.shape[1:3])
    x = (x.astype(jnp.float32) + pe).astype(jnp.bfloat16)
    outputs = []
    for i, (bc, bp) in enumerate(zip(block_cfgs, params["blocks"])):
        x = multiscale_block(x, bp, bc["dim"], bc["dim_out"], bc["num_heads"],
                             bc["window_size"], bc["q_stride"])
        if i == stage_ends[-1] or (i in stage_ends and return_interm_layers):
            outputs.append(x.transpose(0, 3, 1, 2))                        # NCHW like torch
    return outputs


# ----------------------------------------------------------------------------
# Config / params (deterministic synthetic init)
# ----------------------------------------------------------------------------
def build_block_cfgs(embed_dim, num_heads, q_pool, q_stride, stages,
                     dim_mul, head_mul, window_spec, global_att_blocks):
    depth = sum(stages)
    stage_ends = [sum(stages[:i]) - 1 for i in range(1, len(stages) + 1)]
    q_pool_blocks = [x + 1 for x in stage_ends[:-1]][:q_pool]
    cur_stage = 1
    cfgs = []
    dim = embed_dim
    heads = num_heads
    for i in range(depth):
        dim_out = dim
        window_size = window_spec[cur_stage - 1]
        if global_att_blocks is not None:
            window_size = 0 if i in global_att_blocks else window_size
        if i - 1 in stage_ends:
            dim_out = int(dim * dim_mul)
            heads = int(heads * head_mul)
            cur_stage += 1
        cfgs.append(dict(dim=dim, dim_out=dim_out, num_heads=heads,
                         window_size=window_size,
                         q_stride=q_stride if i in q_pool_blocks else None))
        dim = dim_out
    return cfgs, stage_ends


def _init_linear(key, fan_in, fan_out):
    kw, kb = jax.random.split(key)
    w = jax.random.normal(kw, (fan_in, fan_out), jnp.float32) * 0.02
    b = jax.random.normal(kb, (fan_out,), jnp.float32) * 0.01
    return w, b


def init_params(key, embed_dim, in_chans, pos_bkg, window_spec, block_cfgs):
    keys = jax.random.split(key, 4 + len(block_cfgs))
    params = {
        "patch_w": jax.random.normal(keys[0], (embed_dim, in_chans, 7, 7), jnp.float32) * 0.02,
        "patch_b": jnp.zeros((embed_dim,), jnp.float32),
        "pos_embed": jax.random.normal(keys[1], (1, embed_dim, pos_bkg[0], pos_bkg[1]), jnp.float32) * 0.02,
        "pos_embed_window": jax.random.normal(
            keys[2], (1, embed_dim, window_spec[0], window_spec[0]), jnp.float32) * 0.02,
    }
    blocks = []
    for i, bc in enumerate(block_cfgs):
        ks = jax.random.split(keys[4 + i], 6)
        d, do = bc["dim"], bc["dim_out"]
        hidden = int(do * 4.0)
        bp = {
            "norm1_g": jnp.ones((d,), jnp.float32),
            "norm1_b": jnp.zeros((d,), jnp.float32),
            "norm2_g": jnp.ones((do,), jnp.float32),
            "norm2_b": jnp.zeros((do,), jnp.float32),
        }
        bp["qkv_w"], bp["qkv_b"] = _init_linear(ks[0], d, 3 * do)
        bp["proj_w"], bp["proj_b"] = _init_linear(ks[1], do, do)
        bp["mlp_w1"], bp["mlp_b1"] = _init_linear(ks[2], do, hidden)
        bp["mlp_w2"], bp["mlp_b2"] = _init_linear(ks[3], hidden, do)
        if d != do:
            bp["projd_w"], bp["projd_b"] = _init_linear(ks[4], d, do)
        blocks.append(bp)
    params["blocks"] = blocks
    return params


def cast_params_bf16(params):
    """Weights live in HBM as bf16 (halves DMA bytes); pos embeds stay f32 for
    the bicubic resize path."""
    out = dict(params)
    out["patch_w"] = _to_bf16(params["patch_w"])
    out["patch_b"] = _to_bf16(params["patch_b"])
    out["blocks"] = [{k: _to_bf16(v) for k, v in bp.items()} for bp in params["blocks"]]
    return out


# ----------------------------------------------------------------------------
if __name__ == "__main__":
    # Small Hiera config: embed_dim=32, 4 stages of 1 block each, window 4,
    # q_pool=2 (blocks 1 and 2 pool), last block is global attention.
    embed_dim = 32
    num_heads = 1
    q_pool = 2
    q_stride = (2, 2)
    stages = (1, 1, 1, 1)
    dim_mul, head_mul = 2.0, 2.0
    window_spec = (4, 4, 4, 4)
    global_att_blocks = (3,)
    pos_bkg = (8, 8)              # == patch-grid size -> bicubic resize is identity
    in_chans = 4                  # PatchEmbed default in this module

    block_cfgs, stage_ends = build_block_cfgs(
        embed_dim, num_heads, q_pool, q_stride, stages,
        dim_mul, head_mul, window_spec, global_att_blocks)

    key = jax.random.PRNGKey(0)
    kp, kx = jax.random.split(key)
    params = init_params(kp, embed_dim, in_chans, pos_bkg, window_spec, block_cfgs)
    params = cast_params_bf16(params)

    # Quick standalone sanity check of the row-tiled LayerNorm kernel (the model
    # path only exercises it when window padding occurs, which this toy avoids).
    kt = jax.random.PRNGKey(1)
    xt = jax.random.normal(kt, (64, 32), jnp.float32)
    g_t = jnp.ones((32,), jnp.float32)
    b_t = jnp.zeros((32,), jnp.float32)
    ln_out = jax.block_until_ready(pallas_layernorm(xt, g_t, b_t))
    ln_ref = (xt - xt.mean(-1, keepdims=True)) / jnp.sqrt(xt.var(-1, keepdims=True) + 1e-6)
    assert bool(jnp.allclose(ln_out, ln_ref, atol=1e-4, rtol=1e-4))

    # Input: NCHW like the PyTorch module. 32x32 image, 7x7/s4 patch embed -> 8x8 tokens.
    x = jax.random.normal(kx, (2, in_chans, 32, 32), jnp.float32)

    fwd = jax.jit(partial(hiera_forward, block_cfgs=block_cfgs, stage_ends=stage_ends,
                          return_interm_layers=True))
    outs = fwd(x, params)
    outs = jax.block_until_ready(outs)

    # Expected multi-scale NCHW outputs:
    expected = [(2, 32, 8, 8), (2, 64, 4, 4), (2, 128, 2, 2), (2, 256, 2, 2)]
    assert [tuple(o.shape) for o in outs] == expected, [o.shape for o in outs]
    assert all(bool(jnp.all(jnp.isfinite(o.astype(jnp.float32)))) for o in outs)

    print("KERNEL_OK")
</pallas_src>

<mosaic_0001>
module attributes {stable_mosaic.version = 11 : i64} {
  func.func @_layernorm_kernel(%arg0: i32, %arg1: memref<64x32xf32, #tpu.memory_space<vmem>>, %arg2: memref<1x32xf32, #tpu.memory_space<vmem>>, %arg3: memref<1x32xf32, #tpu.memory_space<vmem>>, %arg4: memref<64x32xf32, #tpu.memory_space<vmem>>) attributes {dimension_semantics = [#tpu.dimension_semantics<parallel>], iteration_bounds = array<i64: 1>, scalar_prefetch = 0 : i64, scratch_operands = 0 : i64, tpu.core_type = #tpu.core_type<tc>, window_params = [{transform_indices = @transform_0, window_bounds = array<i64: 64, 32>}, {pipeline_mode = #tpu.pipeline_mode<synchronous>, transform_indices = @transform_1, window_bounds = array<i64: 1, 32>}, {pipeline_mode = #tpu.pipeline_mode<synchronous>, transform_indices = @transform_2, window_bounds = array<i64: 1, 32>}, {transform_indices = @transform_3, window_bounds = array<i64: 64, 32>}]} {
    %c0 = arith.constant 0 : index
    %c0_0 = arith.constant 0 : index
    %0 = vector.load %arg1[%c0, %c0_0] : memref<64x32xf32, #tpu.memory_space<vmem>>, vector<64x32xf32>
    %cst = arith.constant dense<0.000000e+00> : vector<64xf32>
    %1 = vector.multi_reduction <add>, %0, %cst [1] : vector<64x32xf32> to vector<64xf32>
    %2 = vector.shape_cast %1 : vector<64xf32> to vector<64x1xf32>
    %cst_1 = arith.constant 3.200000e+01 : f32
    %3 = vector.broadcast %cst_1 : f32 to vector<64x1xf32>
    %4 = arith.divf %2, %3 : vector<64x1xf32>
    %5 = vector.broadcast %4 : vector<64x1xf32> to vector<64x32xf32>
    %6 = arith.subf %0, %5 : vector<64x32xf32>
    %7 = arith.mulf %6, %6 : vector<64x32xf32>
    %cst_2 = arith.constant dense<0.000000e+00> : vector<64xf32>
    %8 = vector.multi_reduction <add>, %7, %cst_2 [1] : vector<64x32xf32> to vector<64xf32>
    %9 = vector.shape_cast %8 : vector<64xf32> to vector<64x1xf32>
    %cst_3 = arith.constant 3.200000e+01 : f32
    %10 = vector.broadcast %cst_3 : f32 to vector<64x1xf32>
    %11 = arith.divf %9, %10 : vector<64x1xf32>
    %cst_4 = arith.constant 9.99999997E-7 : f32
    %12 = vector.broadcast %cst_4 : f32 to vector<64x1xf32>
    %13 = arith.addf %11, %12 : vector<64x1xf32>
    %14 = math.rsqrt %13 : vector<64x1xf32>
    %15 = vector.broadcast %14 : vector<64x1xf32> to vector<64x32xf32>
    %16 = arith.mulf %6, %15 : vector<64x32xf32>
    %c0_5 = arith.constant 0 : index
    %c0_6 = arith.constant 0 : index
    %17 = vector.load %arg2[%c0_5, %c0_6] : memref<1x32xf32, #tpu.memory_space<vmem>>, vector<1x32xf32>
    %18 = vector.broadcast %17 : vector<1x32xf32> to vector<64x32xf32>
    %19 = arith.mulf %16, %18 : vector<64x32xf32>
    %c0_7 = arith.constant 0 : index
    %c0_8 = arith.constant 0 : index
    %20 = vector.load %arg3[%c0_7, %c0_8] : memref<1x32xf32, #tpu.memory_space<vmem>>, vector<1x32xf32>
    %21 = vector.broadcast %20 : vector<1x32xf32> to vector<64x32xf32>
    %22 = arith.addf %19, %21 : vector<64x32xf32>
    %c0_9 = arith.constant 0 : index
    %c0_10 = arith.constant 0 : index
    %23 = vector.load %arg4[%c0_9, %c0_10] : memref<64x32xf32, #tpu.memory_space<vmem>>, vector<64x32xf32>
    tpu.vector_store %arg4[%c0_9, %c0_10], %22 {strides = array<i32>} : memref<64x32xf32, #tpu.memory_space<vmem>>, vector<64x32xf32>,
    return
  }
  func.func @transform_0(%arg0: i32) -> (i32, i32) {
    %c0_i32 = arith.constant 0 : i32
    %c0_i32_0 = arith.constant 0 : i32
    return %arg0, %c0_i32 : i32, i32
  }
  func.func @transform_1(%arg0: i32) -> (i32, i32) {
    %c0_i32 = arith.constant 0 : i32
    %c0_i32_0 = arith.constant 0 : i32
    %c0_i32_1 = arith.constant 0 : i32
    return %c0_i32, %c0_i32_0 : i32, i32
  }
  func.func @transform_2(%arg0: i32) -> (i32, i32) {
    %c0_i32 = arith.constant 0 : i32
    %c0_i32_0 = arith.constant 0 : i32
    %c0_i32_1 = arith.constant 0 : i32
    return %c0_i32, %c0_i32_0 : i32, i32
  }
  func.func @transform_3(%arg0: i32) -> (i32, i32) {
    %c0_i32 = arith.constant 0 : i32
    %c0_i32_0 = arith.constant 0 : i32
    return %arg0, %c0_i32 : i32, i32
  }
}

</mosaic_0001>

<llo_original>
// kernel: tpu_custom_call.1
$region0: #{tpu_custom_call.1}
  #allocation0 [shape = 'u32[]', space=smem, size = 0x4, offset = 0x4, fixed_abs, tag = 'smem constant byte address 0x4 - core index']
  #allocation1 [shape = 'u32[72,128]{1,0:T(1,128)}', space=vmem, size = 0x9000, scoped, tag = 'internal scratch']
  %s0 = inlined_call_operand.vmem [shape: f32[64,32], index: 0, kind: input, shape index: {}]
  %s1 = inlined_call_operand.vmem [shape: f32[1,32], index: 1, kind: input, shape index: {}]
  %s2 = inlined_call_operand.vmem [shape: f32[1,32], index: 2, kind: input, shape index: {}]
  %s3 = inlined_call_operand.vmem [shape: f32[64,32], index: 3, kind: output, shape index: {}]
  %s4 = sld [smem:[#allocation0]]
  $region22: #{tpu_custom_call.1} parent=0
    _
  %s6 = ssub.s32 1, %s4
  %s7 = scalar_select 0, %s6, %s4
  // Predicated region
  $region2: #{tpu_custom_call.1} parent=0 // pred_check
    _
  $region3: #{tpu_custom_call.1} parent=0 // pred_check_branch
    %9 = sbr.rel (0) target = $region5
  $region4: #{tpu_custom_call.1} parent=0 // pred_region
    _
  $region5: #{tpu_custom_call.1} parent=0 // pred_fallthru
    _
  // Predicated region
  $region6: #{tpu_custom_call.1} parent=0 // pred_check
    _
  $region7: #{tpu_custom_call.1} parent=0 // pred_check_branch
    %11 = sbr.rel (0) target = $region9
  $region8: #{tpu_custom_call.1} parent=0 // pred_region
    _
  $region9: #{tpu_custom_call.1} parent=0 // pred_fallthru
    _
  // Predicated region
  $region10: #{tpu_custom_call.1} parent=0 // pred_check
    _
  $region11: #{tpu_custom_call.1} parent=0 // pred_check_branch
    %13 = sbr.rel (0) target = $region13
  $region12: #{tpu_custom_call.1} parent=0 // pred_region
    _
  $region13: #{tpu_custom_call.1} parent=0 // pred_fallthru
    _
  %v14 = vld [vmem:[%s0] sm:$0xff]
  %v15 = vld [vmem:[%s0 + $0x8] sm:$0xff]
  %v16 = vld [vmem:[%s0 + $0x10] sm:$0xff]
  %v17 = vld [vmem:[%s0 + $0x18] sm:$0xff]
  %v18 = vld [vmem:[%s0 + $0x20] sm:$0xff]
  %v19 = vld [vmem:[%s0 + $0x28] sm:$0xff]
  %v20 = vld [vmem:[%s0 + $0x30] sm:$0xff]
  %v21 = vld [vmem:[%s0 + $0x38] sm:$0xff]
  %vm22 = vcmask 261120
  %v23 = vsel %vm22, %v14, 0.0
  %24 = vadd.xlane.f32.xlu0 %v23
  %v25 = vpop.xlane.xlu0 %24
  %v26 = vsel %vm22, %v15, 0.0
  %27 = vadd.xlane.f32.xlu0 %v26
  %v28 = vpop.xlane.xlu0 %27
  %v29 = vsel %vm22, %v16, 0.0
  %30 = vadd.xlane.f32.xlu0 %v29
  %v31 = vpop.xlane.xlu0 %30
  %v32 = vsel %vm22, %v17, 0.0
  %33 = vadd.xlane.f32.xlu0 %v32
  %v34 = vpop.xlane.xlu0 %33
  %v35 = vsel %vm22, %v18, 0.0
  %36 = vadd.xlane.f32.xlu0 %v35
  %v37 = vpop.xlane.xlu0 %36
  %v38 = vsel %vm22, %v19, 0.0
  %39 = vadd.xlane.f32.xlu0 %v38
  %v40 = vpop.xlane.xlu0 %39
  %v41 = vsel %vm22, %v20, 0.0
  %42 = vadd.xlane.f32.xlu0 %v41
  %v43 = vpop.xlane.xlu0 %42
  %v44 = vsel %vm22, %v21, 0.0
  %45 = vadd.xlane.f32.xlu0 %v44
  %v46 = vpop.xlane.xlu0 %45
  %v47 = vrcp.pop 32.0
  %v48 = vmul.f32 32.0, %v47
  %v49 = vsub.f32 1.0, %v48
  %v50 = vmul.f32 %v47, %v49
  %v51 = vadd.f32 %v47, %v50
  %vm52 = vweird.f32 %v47
  %v53 = vsel %vm52, %v47, %v51
  %v54 = vmul.f32 %v25, %v53
  %v55 = vmul.f32 %v28, %v53
  %v56 = vmul.f32 %v31, %v53
  %v57 = vmul.f32 %v34, %v53
  %v58 = vmul.f32 %v37, %v53
  %v59 = vmul.f32 %v40, %v53
  %v60 = vmul.f32 %v43, %v53
  %v61 = vmul.f32 %v46, %v53
  %v62 = vsub.f32 %v14, %v54
  %v63 = vsub.f32 %v15, %v55
  %v64 = vsub.f32 %v16, %v56
  %v65 = vsub.f32 %v17, %v57
  %v66 = vsub.f32 %v18, %v58
  %v67 = vsub.f32 %v19, %v59
  %v68 = vsub.f32 %v20, %v60
  %v69 = vsub.f32 %v21, %v61
  %v70 = vmul.f32 %v62, %v62
  %v71 = vmul.f32 %v63, %v63
  %v72 = vmul.f32 %v64, %v64
  %v73 = vmul.f32 %v65, %v65
  %v74 = vmul.f32 %v66, %v66
  %v75 = vmul.f32 %v67, %v67
  %v76 = vmul.f32 %v68, %v68
  %v77 = vmul.f32 %v69, %v69
  %v78 = vsel %vm22, %v70, 0.0
  %79 = vadd.xlane.f32.xlu0 %v78
  %v80 = vpop.xlane.xlu0 %79
  %v81 = vsel %vm22, %v71, 0.0
  %82 = vadd.xlane.f32.xlu0 %v81
  %v83 = vpop.xlane.xlu0 %82
  %v84 = vsel %vm22, %v72, 0.0
  %85 = vadd.xlane.f32.xlu0 %v84
  %v86 = vpop.xlane.xlu0 %85
  %v87 = vsel %vm22, %v73, 0.0
  %88 = vadd.xlane.f32.xlu0 %v87
  %v89 = vpop.xlane.xlu0 %88
  %v90 = vsel %vm22, %v74, 0.0
  %91 = vadd.xlane.f32.xlu0 %v90
  %v92 = vpop.xlane.xlu0 %91
  %v93 = vsel %vm22, %v75, 0.0
  %94 = vadd.xlane.f32.xlu0 %v93
  %v95 = vpop.xlane.xlu0 %94
  %v96 = vsel %vm22, %v76, 0.0
  %97 = vadd.xlane.f32.xlu0 %v96
  %v98 = vpop.xlane.xlu0 %97
  %v99 = vsel %vm22, %v77, 0.0
  %100 = vadd.xlane.f32.xlu0 %v99
  %v101 = vpop.xlane.xlu0 %100
  %v102 = vmul.f32 %v80, %v53
  %v103 = vmul.f32 %v83, %v53
  %v104 = vmul.f32 %v86, %v53
  %v105 = vmul.f32 %v89, %v53
  %v106 = vmul.f32 %v92, %v53
  %v107 = vmul.f32 %v95, %v53
  %v108 = vmul.f32 %v98, %v53
  %v109 = vmul.f32 %v101, %v53
  %v110 = vadd.f32 %v102, 1e-06
  %v111 = vadd.f32 %v103, 1e-06
  %v112 = vadd.f32 %v104, 1e-06
  %v113 = vadd.f32 %v105, 1e-06
  %v114 = vadd.f32 %v106, 1e-06
  %v115 = vadd.f32 %v107, 1e-06
  %v116 = vadd.f32 %v108, 1e-06
  %v117 = vadd.f32 %v109, 1e-06
  %v118 = vrsqrt.pop %v110
  %v119 = vmul.f32 %v118, %v110
  %v120 = vmul.f32 %v119, %v118
  %v121 = vmul.f32 0.5, %v120
  %v122 = vsub.f32 1.5, %v121
  %v123 = vmul.f32 %v118, %v122
  %vm124 = vweird.f32 %v110
  %vm125 = vweird.f32 %v118
  %vm126 = vmor %vm124, %vm125
  %v127 = vsel %vm126, %v118, %v123
  %v128 = vrsqrt.pop %v111
  %v129 = vmul.f32 %v128, %v111
  %v130 = vmul.f32 %v129, %v128
  %v131 = vmul.f32 0.5, %v130
  %v132 = vsub.f32 1.5, %v131
  %v133 = vmul.f32 %v128, %v132
  %vm134 = vweird.f32 %v111
  %vm135 = vweird.f32 %v128
  %vm136 = vmor %vm134, %vm135
  %v137 = vsel %vm136, %v128, %v133
  %v138 = vrsqrt.pop %v112
  %v139 = vmul.f32 %v138, %v112
  %v140 = vmul.f32 %v139, %v138
  %v141 = vmul.f32 0.5, %v140
  %v142 = vsub.f32 1.5, %v141
  %v143 = vmul.f32 %v138, %v142
  %vm144 = vweird.f32 %v112
  %vm145 = vweird.f32 %v138
  %vm146 = vmor %vm144, %vm145
  %v147 = vsel %vm146, %v138, %v143
  %v148 = vrsqrt.pop %v113
  %v149 = vmul.f32 %v148, %v113
  %v150 = vmul.f32 %v149, %v148
  %v151 = vmul.f32 0.5, %v150
  %v152 = vsub.f32 1.5, %v151
  %v153 = vmul.f32 %v148, %v152
  %vm154 = vweird.f32 %v113
  %vm155 = vweird.f32 %v148
  %vm156 = vmor %vm154, %vm155
  %v157 = vsel %vm156, %v148, %v153
  %v158 = vrsqrt.pop %v114
  %v159 = vmul.f32 %v158, %v114
  %v160 = vmul.f32 %v159, %v158
  %v161 = vmul.f32 0.5, %v160
  %v162 = vsub.f32 1.5, %v161
  %v163 = vmul.f32 %v158, %v162
  %vm164 = vweird.f32 %v114
  %vm165 = vweird.f32 %v158
  %vm166 = vmor %vm164, %vm165
  %v167 = vsel %vm166, %v158, %v163
  %v168 = vrsqrt.pop %v115
  %v169 = vmul.f32 %v168, %v115
  %v170 = vmul.f32 %v169, %v168
  %v171 = vmul.f32 0.5, %v170
  %v172 = vsub.f32 1.5, %v171
  %v173 = vmul.f32 %v168, %v172
  %vm174 = vweird.f32 %v115
  %vm175 = vweird.f32 %v168
  %vm176 = vmor %vm174, %vm175
  %v177 = vsel %vm176, %v168, %v173
  %v178 = vrsqrt.pop %v116
  %v179 = vmul.f32 %v178, %v116
  %v180 = vmul.f32 %v179, %v178
  %v181 = vmul.f32 0.5, %v180
  %v182 = vsub.f32 1.5, %v181
  %v183 = vmul.f32 %v178, %v182
  %vm184 = vweird.f32 %v116
  %vm185 = vweird.f32 %v178
  %vm186 = vmor %vm184, %vm185
  %v187 = vsel %vm186, %v178, %v183
  %v188 = vrsqrt.pop %v117
  %v189 = vmul.f32 %v188, %v117
  %v190 = vmul.f32 %v189, %v188
  %v191 = vmul.f32 0.5, %v190
  %v192 = vsub.f32 1.5, %v191
  %v193 = vmul.f32 %v188, %v192
  %vm194 = vweird.f32 %v117
  %vm195 = vweird.f32 %v188
  %vm196 = vmor %vm194, %vm195
  %v197 = vsel %vm196, %v188, %v193
  %v198 = vmul.f32 %v62, %v127
  %v199 = vmul.f32 %v63, %v137
  %v200 = vmul.f32 %v64, %v147
  %v201 = vmul.f32 %v65, %v157
  %v202 = vmul.f32 %v66, %v167
  %v203 = vmul.f32 %v67, %v177
  %v204 = vmul.f32 %v68, %v187
  %v205 = vmul.f32 %v69, %v197
  %v206 = vld [vmem:[%s1] sm:$0x1]
  %v208 = vperm.slane %v206, 0
  %v210 = vmul.f32 %v198, %v208
  %v211 = vmul.f32 %v199, %v208
  %v212 = vmul.f32 %v200, %v208
  %v213 = vmul.f32 %v201, %v208
  %v214 = vmul.f32 %v202, %v208
  %v215 = vmul.f32 %v203, %v208
  %v216 = vmul.f32 %v204, %v208
  %v217 = vmul.f32 %v205, %v208
  %v218 = vld [vmem:[%s2] sm:$0x1]
  %v220 = vperm.slane %v218, 0
  %v222 = vadd.f32 %v210, %v220
  %v223 = vadd.f32 %v211, %v220
  %v224 = vadd.f32 %v212, %v220
  %v225 = vadd.f32 %v213, %v220
  %v226 = vadd.f32 %v214, %v220
  %v227 = vadd.f32 %v215, %v220
  %v228 = vadd.f32 %v216, %v220
  %v229 = vadd.f32 %v217, %v220
  %230 = vst.msk [vmem:[%s3] sm:$0xff] %vm22, %v222
  %231 = vst.msk [vmem:[%s3 + $0x8] sm:$0xff] %vm22, %v223
  %232 = vst.msk [vmem:[%s3 + $0x10] sm:$0xff] %vm22, %v224
  %233 = vst.msk [vmem:[%s3 + $0x18] sm:$0xff] %vm22, %v225
  %234 = vst.msk [vmem:[%s3 + $0x20] sm:$0xff] %vm22, %v226
  %235 = vst.msk [vmem:[%s3 + $0x28] sm:$0xff] %vm22, %v227
  %236 = vst.msk [vmem:[%s3 + $0x30] sm:$0xff] %vm22, %v228
  %237 = vst.msk [vmem:[%s3 + $0x38] sm:$0xff] %vm22, %v229
  // Predicated region
  $region14: #{tpu_custom_call.1} parent=0 // pred_check
    _
  $region15: #{tpu_custom_call.1} parent=0 // pred_check_branch
    %239 = sbr.rel (0) target = $region17
  $region16: #{tpu_custom_call.1} parent=0 // pred_region
    _
  $region17: #{tpu_custom_call.1} parent=0 // pred_fallthru
    _
  // Predicated region
  $region18: #{tpu_custom_call.1} parent=0 // pred_check
    _
  $region19: #{tpu_custom_call.1} parent=0 // pred_check_branch
    %241 = sbr.rel (0) target = $region21
  $region20: #{tpu_custom_call.1} parent=0 // pred_region
    _
  $region21: #{tpu_custom_call.1} parent=0 // pred_fallthru
    _

</llo_original>
